<compile_context>
chip_gen: v5e
topology: v5e:2x2
jax: 0.10.0
libtpu: 0.0.40
codegen_flags: <defaults>
</compile_context>

<pallas_src>
import functools

import jax
import jax.numpy as jnp
from jax.experimental import pallas as pl
from jax.experimental.pallas import tpu as pltpu


# ---------------------------------------------------------------------------
# Kernel
# ---------------------------------------------------------------------------
def _encoder_image_kernel(x_ref, w_ref, b_ref, o_ref, *, no_imgnorm, use_abs):
    """One batch tile: y = x @ W + b ; optional row-L2-normalize ; optional abs."""
    x = x_ref[...]                               # [TILE_B, D_in]  (native dtype)
    w = w_ref[...]                               # [D_in, D_out]   (native dtype)
    b = b_ref[...].astype(jnp.float32)           # [1, D_out]

    # MXU matmul with f32 accumulation.
    y = jnp.dot(x, w, preferred_element_type=jnp.float32) + b   # [TILE_B, D_out] f32

    if not no_imgnorm:
        # Row L2 norm: cross-lane reduce (XLU) + rsqrt (EUP) + VPU multiply.
        # Matches torch l2norm exactly (no eps; an all-zero row -> NaN, as in torch).
        sumsq = jnp.sum(y * y, axis=1, keepdims=True)            # [TILE_B, 1]
        y = y * jax.lax.rsqrt(sumsq)

    if use_abs:
        y = jnp.abs(y)

    o_ref[...] = y.astype(o_ref.dtype)


# ---------------------------------------------------------------------------
# One-time parameter prep (hoisted out of the forward path)
# ---------------------------------------------------------------------------
def prepare_encoder_image_params(weight, bias, param_dtype=None):
    """weight: torch nn.Linear layout [D_out, D_in] -> W^T [D_in, D_out];
    bias: [D_out] -> [1, D_out].  Optionally cast params (e.g. jnp.bfloat16) once.
    Note: on v7x quantize to bf16/fp8 only (its MXU has no int path)."""
    w_t = jnp.transpose(weight)
    b2 = bias.reshape(1, -1)
    if param_dtype is not None:
        w_t = w_t.astype(param_dtype)
        b2 = b2.astype(param_dtype)
    return w_t, b2


# ---------------------------------------------------------------------------
# Sizing helpers
# ---------------------------------------------------------------------------
def _vmem_capacity_bytes():
    try:
        return int(pltpu.get_tpu_info().vmem_capacity_bytes)
    except Exception:
        return 64 * 1024 * 1024  # conservative default: v7x per-TC VMEM


def _sublane_align(dtype):
    # Rows per packed sublane group: f32 -> 8, bf16 -> 16, int8/fp8 -> 32.
    return {4: 8, 2: 16, 1: 32}.get(jnp.dtype(dtype).itemsize, 8)


# ---------------------------------------------------------------------------
# Forward
# ---------------------------------------------------------------------------
def encoder_image_forward(features, w_t, b2, *, no_imgnorm=False, use_abs=False,
                          tile_b=None, out_dtype=None):
    """features: [B, D_in]; w_t: [D_in, D_out] (pre-transposed); b2: [1, D_out]."""
    B, D_in = features.shape
    D_in_w, D_out = w_t.shape
    assert D_in == D_in_w, "weight must be pre-transposed to [D_in, D_out]"
    out_dtype = features.dtype if out_dtype is None else out_dtype

    x_bytes = jnp.dtype(features.dtype).itemsize
    w_bytes = jnp.dtype(w_t.dtype).itemsize
    o_bytes = jnp.dtype(out_dtype).itemsize
    align = _sublane_align(features.dtype)

    vmem_cap = _vmem_capacity_bytes()
    tiling_budget = int(0.60 * vmem_cap)          # headroom for Mosaic scratch/regalloc
    margin = 1 << 20                              # MXU staging / misc margin

    # Resident (ideally single-buffered) operands.
    resident = D_in * D_out * w_bytes + D_out * 4
    if resident + margin > tiling_budget:
        # TODO(synk): weights too large to sit resident in VMEM need a second grid
        # axis over D_out (per-row sumsq scratch + second-pass rsqrt scaling).
        raise NotImplementedError(
            "fc1 weight does not fit the VMEM budget for the resident-weight kernel")

    # Per-row VMEM cost: double-buffered x + double-buffered out + in-kernel f32 y.
    per_row = 2 * D_in * x_bytes + 2 * D_out * o_bytes + D_out * 4
    max_tile = (tiling_budget - resident - margin) // per_row
    max_tile = max(align, (max_tile // align) * align)

    if tile_b is None:
        tb = min(B, 1024, max_tile)
        if tb >= B and B >= 2048:
            # Big batch: keep >=2 grid steps so a 2-TensorCore chip (v7x) has
            # work for both cores under dimension_semantics=("parallel",).
            tb = -(-B // 2)
    else:
        tb = min(tile_b, B, max_tile)

    if tb < B:
        tb = max(align, (tb // align) * align)    # sublane-packing alignment
        if tb >= 256:
            tb = (tb // 256) * 256                # clean MXU M-dim tiling
    else:
        tb = B                                    # single-step: full-dim block is legal
    grid = (pl.cdiv(B, tb),)

    # VMEM accounting (includes the in-kernel f32 intermediate).
    est = (2 * tb * D_in * x_bytes
           + 2 * tb * D_out * o_bytes
           + tb * D_out * 4
           + resident
           + margin)
    vmem_limit = int(min(max(1.25 * est, 32 * 1024 * 1024), 0.80 * vmem_cap))
    vmem_limit = max(vmem_limit, int(est))

    compiler_params = pltpu.CompilerParams(
        dimension_semantics=("parallel",),        # rows are independent
        vmem_limit_bytes=vmem_limit,
    )

    kernel = functools.partial(_encoder_image_kernel,
                               no_imgnorm=no_imgnorm, use_abs=use_abs)
    out_shape = jax.ShapeDtypeStruct((B, D_out), out_dtype)

    def run(single_buffer_resident):
        res_kwargs = (dict(pipeline_mode=pl.Buffered(1))
                      if single_buffer_resident else {})
        in_specs = [
            pl.BlockSpec((tb, D_in), lambda i: (i, 0)),                    # streamed x
            pl.BlockSpec((D_in, D_out), lambda i: (0, 0), **res_kwargs),   # resident W
            pl.BlockSpec((1, D_out), lambda i: (0, 0), **res_kwargs),      # resident b
        ]
        out_specs = pl.BlockSpec((tb, D_out), lambda i: (i, 0))
        return pl.pallas_call(
            kernel,
            out_shape=out_shape,
            grid=grid,
            in_specs=in_specs,
            out_specs=out_specs,
            compiler_params=compiler_params,
        )(features, w_t, b2)

    try:
        # Weight/bias block index never changes -> single-buffer them to halve
        # their VMEM footprint.
        return run(single_buffer_resident=True)
    except Exception:
        # Fallback for jax versions that reject Buffered(1) on inputs; the
        # constant index_map still keeps them VMEM-resident (double-buffered).
        return run(single_buffer_resident=False)


# ---------------------------------------------------------------------------
# Demo / self-test
# ---------------------------------------------------------------------------
if __name__ == "__main__":
    # Small shapes consistent with the module: batch=64, input_dim=32, embed=128.
    B, D_in, D_out = 64, 32, 128

    key = jax.random.PRNGKey(0)
    k_x, k_w, k_b = jax.random.split(key, 3)

    # Deterministic "parameters" (mimic nn.Linear uniform init bounds).
    bound = 1.0 / (D_in ** 0.5)
    weight = jax.random.uniform(k_w, (D_out, D_in), jnp.float32, -bound, bound)
    bias = jax.random.uniform(k_b, (D_out,), jnp.float32, -bound, bound)
    features = jax.random.normal(k_x, (B, D_in), jnp.float32)

    # One-time parameter prep.
    w_t, b2 = prepare_encoder_image_params(weight, bias)

    # Pure-JAX reference (eval-mode dropout == identity).
    ref_lin = features @ weight.T + bias
    ref_norm = ref_lin / jnp.sqrt(jnp.sum(ref_lin * ref_lin, axis=1, keepdims=True))

    # 1) Default config: auto tile -> single grid step for this tiny problem.
    out = jax.block_until_ready(
        encoder_image_forward(features, w_t, b2, no_imgnorm=False, use_abs=False))
    assert out.shape == (B, D_out)
    assert jnp.allclose(out, ref_norm, atol=1e-5, rtol=1e-5)

    # 2) Forced multi-step pipeline (grid of 4) + use_abs / no_imgnorm branch.
    out2 = jax.block_until_ready(
        encoder_image_forward(features, w_t, b2, no_imgnorm=True, use_abs=True,
                              tile_b=16))
    assert jnp.allclose(out2, jnp.abs(ref_lin), atol=1e-5, rtol=1e-5)

    # 3) bf16 end-to-end path (production perf config: half HBM traffic,
    #    native bf16 MXU, f32 accumulation kept inside the kernel).
    w_t_bf16, b2_bf16 = prepare_encoder_image_params(weight, bias,
                                                     param_dtype=jnp.bfloat16)
    out3 = jax.block_until_ready(
        encoder_image_forward(features.astype(jnp.bfloat16), w_t_bf16, b2_bf16,
                              no_imgnorm=False, use_abs=False, tile_b=32))
    assert out3.dtype == jnp.bfloat16
    assert jnp.allclose(out3.astype(jnp.float32), ref_norm, atol=2e-2, rtol=2e-2)

    print("KERNEL_OK")
</pallas_src>

<mosaic_0001>
module attributes {stable_mosaic.version = 11 : i64} {
  func.func @_encoder_image_kernel(%arg0: i32, %arg1: memref<64x32xf32, #tpu.memory_space<vmem>>, %arg2: memref<32x128xf32, #tpu.memory_space<vmem>>, %arg3: memref<1x128xf32, #tpu.memory_space<vmem>>, %arg4: memref<64x128xf32, #tpu.memory_space<vmem>>) attributes {dimension_semantics = [#tpu.dimension_semantics<parallel>], iteration_bounds = array<i64: 1>, scalar_prefetch = 0 : i64, scratch_operands = 0 : i64, tpu.core_type = #tpu.core_type<tc>, window_params = [{transform_indices = @transform_0, window_bounds = array<i64: 64, 32>}, {pipeline_mode = #tpu.pipeline_mode<synchronous>, transform_indices = @transform_1, window_bounds = array<i64: 32, 128>}, {pipeline_mode = #tpu.pipeline_mode<synchronous>, transform_indices = @transform_2, window_bounds = array<i64: 1, 128>}, {transform_indices = @transform_3, window_bounds = array<i64: 64, 128>}]} {
    %c0 = arith.constant 0 : index
    %c0_0 = arith.constant 0 : index
    %0 = vector.load %arg1[%c0, %c0_0] : memref<64x32xf32, #tpu.memory_space<vmem>>, vector<64x32xf32>
    %c0_1 = arith.constant 0 : index
    %c0_2 = arith.constant 0 : index
    %1 = vector.load %arg2[%c0_1, %c0_2] : memref<32x128xf32, #tpu.memory_space<vmem>>, vector<32x128xf32>
    %c0_3 = arith.constant 0 : index
    %c0_4 = arith.constant 0 : index
    %2 = vector.load %arg3[%c0_3, %c0_4] : memref<1x128xf32, #tpu.memory_space<vmem>>, vector<1x128xf32>
    %cst = arith.constant dense<0.000000e+00> : vector<64x128xf32>
    %3 = tpu.matmul %0, %1, %cst {dimension_numbers = #tpu.dot_dimension_numbers<[1], [0], [0], [1], [0, 0, 1, 1], [], []>} : vector<64x32xf32>, vector<32x128xf32>, vector<64x128xf32> -> vector<64x128xf32>
    %4 = vector.broadcast %2 : vector<1x128xf32> to vector<64x128xf32>
    %5 = arith.addf %3, %4 : vector<64x128xf32>
    %6 = arith.mulf %5, %5 : vector<64x128xf32>
    %cst_5 = arith.constant dense<0.000000e+00> : vector<64xf32>
    %7 = vector.multi_reduction <add>, %6, %cst_5 [1] : vector<64x128xf32> to vector<64xf32>
    %8 = vector.shape_cast %7 : vector<64xf32> to vector<64x1xf32>
    %9 = math.rsqrt %8 : vector<64x1xf32>
    %10 = vector.broadcast %9 : vector<64x1xf32> to vector<64x128xf32>
    %11 = arith.mulf %5, %10 : vector<64x128xf32>
    %c0_6 = arith.constant 0 : index
    %c0_7 = arith.constant 0 : index
    %12 = vector.load %arg4[%c0_6, %c0_7] : memref<64x128xf32, #tpu.memory_space<vmem>>, vector<64x128xf32>
    tpu.vector_store %arg4[%c0_6, %c0_7], %11 {strides = array<i32>} : memref<64x128xf32, #tpu.memory_space<vmem>>, vector<64x128xf32>,
    return
  }
  func.func @transform_0(%arg0: i32) -> (i32, i32) {
    %c0_i32 = arith.constant 0 : i32
    %c0_i32_0 = arith.constant 0 : i32
    return %arg0, %c0_i32 : i32, i32
  }
  func.func @transform_1(%arg0: i32) -> (i32, i32) {
    %c0_i32 = arith.constant 0 : i32
    %c0_i32_0 = arith.constant 0 : i32
    %c0_i32_1 = arith.constant 0 : i32
    return %c0_i32, %c0_i32_0 : i32, i32
  }
  func.func @transform_2(%arg0: i32) -> (i32, i32) {
    %c0_i32 = arith.constant 0 : i32
    %c0_i32_0 = arith.constant 0 : i32
    %c0_i32_1 = arith.constant 0 : i32
    return %c0_i32, %c0_i32_0 : i32, i32
  }
  func.func @transform_3(%arg0: i32) -> (i32, i32) {
    %c0_i32 = arith.constant 0 : i32
    %c0_i32_0 = arith.constant 0 : i32
    return %arg0, %c0_i32 : i32, i32
  }
}

module attributes {stable_mosaic.version = 11 : i64} {
  func.func @_encoder_image_kernel(%arg0: i32, %arg1: memref<64x32xf32, #tpu.memory_space<vmem>>, %arg2: memref<32x128xf32, #tpu.memory_space<vmem>>, %arg3: memref<1x128xf32, #tpu.memory_space<vmem>>, %arg4: memref<64x128xf32, #tpu.memory_space<vmem>>) attributes {dimension_semantics = [#tpu.dimension_semantics<parallel>], iteration_bounds = array<i64: 1>, scalar_prefetch = 0 : i64, scratch_operands = 0 : i64, tpu.core_type = #tpu.core_type<tc>, window_params = [{transform_indices = @transform_0, window_bounds = array<i64: 64, 32>}, {pipeline_mode = #tpu.pipeline_mode<synchronous>, transform_indices = @transform_1, window_bounds = array<i64: 32, 128>}, {pipeline_mode = #tpu.pipeline_mode<synchronous>, transform_indices = @transform_2, window_bounds = array<i64: 1, 128>}, {transform_indices = @transform_3, window_bounds = array<i64: 64, 128>}]} {
    %c0 = arith.constant 0 : index
    %c0_0 = arith.constant 0 : index
    %0 = vector.load %arg1[%c0, %c0_0] : memref<64x32xf32, #tpu.memory_space<vmem>>, vector<64x32xf32>
    %c0_1 = arith.constant 0 : index
    %c0_2 = arith.constant 0 : index
    %1 = vector.load %arg2[%c0_1, %c0_2] : memref<32x128xf32, #tpu.memory_space<vmem>>, vector<32x128xf32>
    %c0_3 = arith.constant 0 : index
    %c0_4 = arith.constant 0 : index
    %2 = vector.load %arg3[%c0_3, %c0_4] : memref<1x128xf32, #tpu.memory_space<vmem>>, vector<1x128xf32>
    %cst = arith.constant dense<0.000000e+00> : vector<64x128xf32>
    %3 = tpu.matmul %0, %1, %cst {dimension_numbers = #tpu.dot_dimension_numbers<[1], [0], [0], [1], [0, 0, 1, 1], [], []>} : vector<64x32xf32>, vector<32x128xf32>, vector<64x128xf32> -> vector<64x128xf32>
    %4 = vector.broadcast %2 : vector<1x128xf32> to vector<64x128xf32>
    %5 = arith.addf %3, %4 : vector<64x128xf32>
    %6 = arith.mulf %5, %5 : vector<64x128xf32>
    %cst_5 = arith.constant dense<0.000000e+00> : vector<64xf32>
    %7 = vector.multi_reduction <add>, %6, %cst_5 [1] : vector<64x128xf32> to vector<64xf32>
    %8 = vector.shape_cast %7 : vector<64xf32> to vector<64x1xf32>
    %9 = math.rsqrt %8 : vector<64x1xf32>
    %10 = vector.broadcast %9 : vector<64x1xf32> to vector<64x128xf32>
    %11 = arith.mulf %5, %10 : vector<64x128xf32>
    %c0_6 = arith.constant 0 : index
    %c0_7 = arith.constant 0 : index
    %12 = vector.load %arg4[%c0_6, %c0_7] : memref<64x128xf32, #tpu.memory_space<vmem>>, vector<64x128xf32>
    tpu.vector_store %arg4[%c0_6, %c0_7], %11 {strides = array<i32>} : memref<64x128xf32, #tpu.memory_space<vmem>>, vector<64x128xf32>,
    return
  }
  func.func @transform_0(%arg0: i32) -> (i32, i32) {
    %c0_i32 = arith.constant 0 : i32
    %c0_i32_0 = arith.constant 0 : i32
    return %arg0, %c0_i32 : i32, i32
  }
  func.func @transform_1(%arg0: i32) -> (i32, i32) {
    %c0_i32 = arith.constant 0 : i32
    %c0_i32_0 = arith.constant 0 : i32
    %c0_i32_1 = arith.constant 0 : i32
    return %c0_i32, %c0_i32_0 : i32, i32
  }
  func.func @transform_2(%arg0: i32) -> (i32, i32) {
    %c0_i32 = arith.constant 0 : i32
    %c0_i32_0 = arith.constant 0 : i32
    %c0_i32_1 = arith.constant 0 : i32
    return %c0_i32, %c0_i32_0 : i32, i32
  }
  func.func @transform_3(%arg0: i32) -> (i32, i32) {
    %c0_i32 = arith.constant 0 : i32
    %c0_i32_0 = arith.constant 0 : i32
    return %arg0, %c0_i32 : i32, i32
  }
}

</mosaic_0001>

<llo_original>
// kernel: tpu_custom_call.1
$region0: #{tpu_custom_call.1}
  #allocation0 [shape = 'u32[]', space=smem, size = 0x4, offset = 0x4, fixed_abs, tag = 'smem constant byte address 0x4 - core index']
  #allocation1 [shape = 'u32[72,128]{1,0:T(1,128)}', space=vmem, size = 0x9000, scoped, tag = 'internal scratch']
  %s0 = inlined_call_operand.vmem [shape: f32[64,32], index: 0, kind: input, shape index: {}]
  %s1 = inlined_call_operand.vmem [shape: f32[32,128], index: 1, kind: input, shape index: {}]
  %s2 = inlined_call_operand.vmem [shape: f32[1,128], index: 2, kind: input, shape index: {}]
  %s3 = inlined_call_operand.hbm [shape: f32[64,128], index: 3, kind: output, shape index: {}]
  %s4 = sld [smem:[#allocation0]]
  $region22: #{tpu_custom_call.1} parent=0
    _
  %s6 = ssub.s32 1, %s4
  %s7 = scalar_select 0, %s6, %s4
  $region1: #{tpu_custom_call.1} parent=0
    #allocation2 [shape = 'u8[32768]{0}', space=vmem, size = 0x8000, scoped, tag = 'output window, operand 0, single buffered']
    #allocation3 [shape = 's32[1]{0}', space=sflag, size = 0x4, scoped, tag = 'scoped memory for tpu_custom_call.1']
    %8 = vsyncpa [#allocation3], 0
    // Predicated region
    $region2: #{tpu_custom_call.1} parent=1 // pred_check
      _
    $region3: #{tpu_custom_call.1} parent=1 // pred_check_branch
      %10 = sbr.rel (0) target = $region5
    $region4: #{tpu_custom_call.1} parent=1 // pred_region
      _
    $region5: #{tpu_custom_call.1} parent=1 // pred_fallthru
      _
    // Predicated region
    $region6: #{tpu_custom_call.1} parent=1 // pred_check
      _
    $region7: #{tpu_custom_call.1} parent=1 // pred_check_branch
      %12 = sbr.rel (0) target = $region9
    $region8: #{tpu_custom_call.1} parent=1 // pred_region
      _
    $region9: #{tpu_custom_call.1} parent=1 // pred_fallthru
      _
    // Predicated region
    $region10: #{tpu_custom_call.1} parent=1 // pred_check
      _
    $region11: #{tpu_custom_call.1} parent=1 // pred_check_branch
      %14 = sbr.rel (0) target = $region13
    $region12: #{tpu_custom_call.1} parent=1 // pred_region
      _
    $region13: #{tpu_custom_call.1} parent=1 // pred_fallthru
      _
    %v15 = vld [vmem:[%s0] sm:$0xff]
    %v16 = vld [vmem:[%s0 + $0x8] sm:$0xff]
    %v17 = vld [vmem:[%s0 + $0x10] sm:$0xff]
    %v18 = vld [vmem:[%s0 + $0x18] sm:$0xff]
    %v19 = vld [vmem:[%s0 + $0x20] sm:$0xff]
    %v20 = vld [vmem:[%s0 + $0x28] sm:$0xff]
    %v21 = vld [vmem:[%s0 + $0x30] sm:$0xff]
    %v22 = vld [vmem:[%s0 + $0x38] sm:$0xff]
    %v23 = vld [vmem:[%s1] sm:$0xff]
    %v24 = vld [vmem:[%s1 + $0x8] sm:$0xff]
    %v25 = vld [vmem:[%s1 + $0x10] sm:$0xff]
    %v26 = vld [vmem:[%s1 + $0x18] sm:$0xff]
    %v27 = vld [vmem:[%s2] sm:$0x1]
    %v29 = vperm.slane %v27, 0
    %vm31 = vcmask 261120
    %v33 = vsel %vm31, %v15, 0
    %v36 = vsel %vm31, %v16, 0
    %v39 = vsel %vm31, %v17, 0
    %v42 = vsel %vm31, %v18, 0
    %v45 = vsel %vm31, %v19, 0
    %v48 = vsel %vm31, %v20, 0
    %v51 = vsel %vm31, %v21, 0
    %v54 = vsel %vm31, %v22, 0
    %56 = vmatpush.msra.mxu0 0.0
    %57 = vmatpush.msra.mxu0 0.0
    %58 = vmatpush.msra.mxu0 0.0
    %59 = vmatpush.msra.mxu0 0.0
    %60 = vmatpush.msra.mxu0 0.0
    %61 = vmatpush.msra.mxu0 0.0
    %62 = vmatpush.msra.mxu0 0.0
    %63 = vmatpush.msra.mxu0 0.0
    %64 = vmatpush.msra.mxu0 0.0
    %65 = vmatpush.msra.mxu0 0.0
    %66 = vmatpush.msra.mxu0 0.0
    %67 = vmatpush.msra.mxu0 0.0
    %68 = vmatpush.msra.mxu0 %v26
    %69 = vmatpush.msra.mxu0 %v25
    %70 = vmatpush.msra.mxu0 %v24
    %71 = vmatpush.msra.mxu0 %v23
    %72 = vmatmul.f32.gmra.mxu0 %v33
    %v73 = vpop.f32.mrf.mxu0
    %v74 = vadd.f32 %v29, %v73
    %75 = vmatmul.f32.gmra.mxu0 %v36
    %v76 = vpop.f32.mrf.mxu0
    %v77 = vadd.f32 %v29, %v76
    %78 = vmatmul.f32.gmra.mxu0 %v39
    %v79 = vpop.f32.mrf.mxu0
    %v80 = vadd.f32 %v29, %v79
    %81 = vmatmul.f32.gmra.mxu0 %v42
    %v82 = vpop.f32.mrf.mxu0
    %v83 = vadd.f32 %v29, %v82
    %84 = vmatmul.f32.gmra.mxu0 %v45
    %v85 = vpop.f32.mrf.mxu0
    %v86 = vadd.f32 %v29, %v85
    %87 = vmatmul.f32.gmra.mxu0 %v48
    %v88 = vpop.f32.mrf.mxu0
    %v89 = vadd.f32 %v29, %v88
    %90 = vmatmul.f32.gmra.mxu0 %v51
    %v91 = vpop.f32.mrf.mxu0
    %v92 = vadd.f32 %v29, %v91
    %93 = vmatmul.f32.gmra.mxu0 %v54
    %v94 = vpop.f32.mrf.mxu0
    %v95 = vadd.f32 %v29, %v94
    %96 = vdwg.mxu0
    %v97 = vmul.f32 %v74, %v74
    %v98 = vmul.f32 %v77, %v77
    %v99 = vmul.f32 %v80, %v80
    %v100 = vmul.f32 %v83, %v83
    %v101 = vmul.f32 %v86, %v86
    %v102 = vmul.f32 %v89, %v89
    %v103 = vmul.f32 %v92, %v92
    %v104 = vmul.f32 %v95, %v95
    %105 = vadd.xlane.f32.xlu0 %v97
    %v106 = vpop.xlane.xlu0 %105
    %107 = vadd.xlane.f32.xlu0 %v98
    %v108 = vpop.xlane.xlu0 %107
    %109 = vadd.xlane.f32.xlu0 %v99
    %v110 = vpop.xlane.xlu0 %109
    %111 = vadd.xlane.f32.xlu0 %v100
    %v112 = vpop.xlane.xlu0 %111
    %113 = vadd.xlane.f32.xlu0 %v101
    %v114 = vpop.xlane.xlu0 %113
    %115 = vadd.xlane.f32.xlu0 %v102
    %v116 = vpop.xlane.xlu0 %115
    %117 = vadd.xlane.f32.xlu0 %v103
    %v118 = vpop.xlane.xlu0 %117
    %119 = vadd.xlane.f32.xlu0 %v104
    %v120 = vpop.xlane.xlu0 %119
    %v121 = vrsqrt.pop %v106
    %v122 = vmul.f32 %v121, %v106
    %v123 = vmul.f32 %v122, %v121
    %v124 = vmul.f32 0.5, %v123
    %v125 = vsub.f32 1.5, %v124
    %v126 = vmul.f32 %v121, %v125
    %vm127 = vweird.f32 %v106
    %vm128 = vweird.f32 %v121
    %vm129 = vmor %vm127, %vm128
    %v130 = vsel %vm129, %v121, %v126
    %v131 = vrsqrt.pop %v108
    %v132 = vmul.f32 %v131, %v108
    %v133 = vmul.f32 %v132, %v131
    %v134 = vmul.f32 0.5, %v133
    %v135 = vsub.f32 1.5, %v134
    %v136 = vmul.f32 %v131, %v135
    %vm137 = vweird.f32 %v108
    %vm138 = vweird.f32 %v131
    %vm139 = vmor %vm137, %vm138
    %v140 = vsel %vm139, %v131, %v136
    %v141 = vrsqrt.pop %v110
    %v142 = vmul.f32 %v141, %v110
    %v143 = vmul.f32 %v142, %v141
    %v144 = vmul.f32 0.5, %v143
    %v145 = vsub.f32 1.5, %v144
    %v146 = vmul.f32 %v141, %v145
    %vm147 = vweird.f32 %v110
    %vm148 = vweird.f32 %v141
    %vm149 = vmor %vm147, %vm148
    %v150 = vsel %vm149, %v141, %v146
    %v151 = vrsqrt.pop %v112
    %v152 = vmul.f32 %v151, %v112
    %v153 = vmul.f32 %v152, %v151
    %v154 = vmul.f32 0.5, %v153
    %v155 = vsub.f32 1.5, %v154
    %v156 = vmul.f32 %v151, %v155
    %vm157 = vweird.f32 %v112
    %vm158 = vweird.f32 %v151
    %vm159 = vmor %vm157, %vm158
    %v160 = vsel %vm159, %v151, %v156
    %v161 = vrsqrt.pop %v114
    %v162 = vmul.f32 %v161, %v114
    %v163 = vmul.f32 %v162, %v161
    %v164 = vmul.f32 0.5, %v163
    %v165 = vsub.f32 1.5, %v164
    %v166 = vmul.f32 %v161, %v165
    %vm167 = vweird.f32 %v114
    %vm168 = vweird.f32 %v161
    %vm169 = vmor %vm167, %vm168
    %v170 = vsel %vm169, %v161, %v166
    %v171 = vrsqrt.pop %v116
    %v172 = vmul.f32 %v171, %v116
    %v173 = vmul.f32 %v172, %v171
    %v174 = vmul.f32 0.5, %v173
    %v175 = vsub.f32 1.5, %v174
    %v176 = vmul.f32 %v171, %v175
    %vm177 = vweird.f32 %v116
    %vm178 = vweird.f32 %v171
    %vm179 = vmor %vm177, %vm178
    %v180 = vsel %vm179, %v171, %v176
    %v181 = vrsqrt.pop %v118
    %v182 = vmul.f32 %v181, %v118
    %v183 = vmul.f32 %v182, %v181
    %v184 = vmul.f32 0.5, %v183
    %v185 = vsub.f32 1.5, %v184
    %v186 = vmul.f32 %v181, %v185
    %vm187 = vweird.f32 %v118
    %vm188 = vweird.f32 %v181
    %vm189 = vmor %vm187, %vm188
    %v190 = vsel %vm189, %v181, %v186
    %v191 = vrsqrt.pop %v120
    %v192 = vmul.f32 %v191, %v120
    %v193 = vmul.f32 %v192, %v191
    %v194 = vmul.f32 0.5, %v193
    %v195 = vsub.f32 1.5, %v194
    %v196 = vmul.f32 %v191, %v195
    %vm197 = vweird.f32 %v120
    %vm198 = vweird.f32 %v191
    %vm199 = vmor %vm197, %vm198
    %v200 = vsel %vm199, %v191, %v196
    %v201 = vmul.f32 %v74, %v130
    %v202 = vmul.f32 %v77, %v140
    %v203 = vmul.f32 %v80, %v150
    %v204 = vmul.f32 %v83, %v160
    %v205 = vmul.f32 %v86, %v170
    %v206 = vmul.f32 %v89, %v180
    %v207 = vmul.f32 %v92, %v190
    %v208 = vmul.f32 %v95, %v200
    %209 = vst [vmem:[#allocation2] sm:$0xff] %v201
    %210 = vst [vmem:[#allocation2 + $0x8] sm:$0xff] %v202
    %211 = vst [vmem:[#allocation2 + $0x10] sm:$0xff] %v203
    %212 = vst [vmem:[#allocation2 + $0x18] sm:$0xff] %v204
    %213 = vst [vmem:[#allocation2 + $0x20] sm:$0xff] %v205
    %214 = vst [vmem:[#allocation2 + $0x28] sm:$0xff] %v206
    %215 = vst [vmem:[#allocation2 + $0x30] sm:$0xff] %v207
    %216 = vst [vmem:[#allocation2 + $0x38] sm:$0xff] %v208
    // Predicated region
    $region14: #{tpu_custom_call.1} parent=1 // pred_check
      _
    $region15: #{tpu_custom_call.1} parent=1 // pred_check_branch
      %218 = sbr.rel (0) target = $region17
    $region16: #{tpu_custom_call.1} parent=1 // pred_region
      %220 = vsyncadd [#allocation3], 0
      %s221 = sshll.u32 [#allocation2], 4
      %s222 = int_to_ptr.vmem [resolvable:$true] %s221
      %s223 = sshll.u32 %s3, 4
      %s224 = int_to_ptr.hbm [resolvable:$true] %s223
      %229 = dma.vmem_to_hbm [thread:$0]  %s222, 1024, %s224, [#allocation3], 128, 128, 8
    $region17: #{tpu_custom_call.1} parent=1 // pred_fallthru
      _
    // Predicated region
    $region18: #{tpu_custom_call.1} parent=1 // pred_check
      _
    $region19: #{tpu_custom_call.1} parent=1 // pred_check_branch
      %231 = sbr.rel (0) target = $region21
    $region20: #{tpu_custom_call.1} parent=1 // pred_region
      %233 = dma.done [#allocation3], 1024
    $region21: #{tpu_custom_call.1} parent=1 // pred_fallthru
      _
    %234 = vsyncpa [#allocation3], 1

// kernel: tpu_custom_call.1
$region0: #{tpu_custom_call.1}
  #allocation0 [shape = 'u32[]', space=smem, size = 0x4, offset = 0x4, fixed_abs, tag = 'smem constant byte address 0x4 - core index']
  #allocation1 [shape = 'u32[72,128]{1,0:T(1,128)}', space=vmem, size = 0x9000, scoped, tag = 'internal scratch']
  %s0 = inlined_call_operand.vmem [shape: f32[64,32], index: 0, kind: input, shape index: {}]
  %s1 = inlined_call_operand.vmem [shape: f32[32,128], index: 1, kind: input, shape index: {}]
  %s2 = inlined_call_operand.vmem [shape: f32[1,128], index: 2, kind: input, shape index: {}]
  %s3 = inlined_call_operand.hbm [shape: f32[64,128], index: 3, kind: output, shape index: {}]
  %s4 = sld [smem:[#allocation0]]
  $region22: #{tpu_custom_call.1} parent=0
    _
  %s6 = ssub.s32 1, %s4
  %s7 = scalar_select 0, %s6, %s4
  $region1: #{tpu_custom_call.1} parent=0
    #allocation2 [shape = 'u8[32768]{0}', space=vmem, size = 0x8000, scoped, tag = 'output window, operand 0, single buffered']
    #allocation3 [shape = 's32[1]{0}', space=sflag, size = 0x4, scoped, tag = 'scoped memory for tpu_custom_call.1']
    %8 = vsyncpa [#allocation3], 0
    // Predicated region
    $region2: #{tpu_custom_call.1} parent=1 // pred_check
      _
    $region3: #{tpu_custom_call.1} parent=1 // pred_check_branch
      %10 = sbr.rel (0) target = $region5
    $region4: #{tpu_custom_call.1} parent=1 // pred_region
      _
    $region5: #{tpu_custom_call.1} parent=1 // pred_fallthru
      _
    // Predicated region
    $region6: #{tpu_custom_call.1} parent=1 // pred_check
      _
    $region7: #{tpu_custom_call.1} parent=1 // pred_check_branch
      %12 = sbr.rel (0) target = $region9
    $region8: #{tpu_custom_call.1} parent=1 // pred_region
      _
    $region9: #{tpu_custom_call.1} parent=1 // pred_fallthru
      _
    // Predicated region
    $region10: #{tpu_custom_call.1} parent=1 // pred_check
      _
    $region11: #{tpu_custom_call.1} parent=1 // pred_check_branch
      %14 = sbr.rel (0) target = $region13
    $region12: #{tpu_custom_call.1} parent=1 // pred_region
      _
    $region13: #{tpu_custom_call.1} parent=1 // pred_fallthru
      _
    %v15 = vld [vmem:[%s0] sm:$0xff]
    %v16 = vld [vmem:[%s0 + $0x8] sm:$0xff]
    %v17 = vld [vmem:[%s0 + $0x10] sm:$0xff]
    %v18 = vld [vmem:[%s0 + $0x18] sm:$0xff]
    %v19 = vld [vmem:[%s0 + $0x20] sm:$0xff]
    %v20 = vld [vmem:[%s0 + $0x28] sm:$0xff]
    %v21 = vld [vmem:[%s0 + $0x30] sm:$0xff]
    %v22 = vld [vmem:[%s0 + $0x38] sm:$0xff]
    %v23 = vld [vmem:[%s1] sm:$0xff]
    %v24 = vld [vmem:[%s1 + $0x8] sm:$0xff]
    %v25 = vld [vmem:[%s1 + $0x10] sm:$0xff]
    %v26 = vld [vmem:[%s1 + $0x18] sm:$0xff]
    %v27 = vld [vmem:[%s2] sm:$0x1]
    %v29 = vperm.slane %v27, 0
    %vm31 = vcmask 261120
    %v33 = vsel %vm31, %v15, 0
    %v36 = vsel %vm31, %v16, 0
    %v39 = vsel %vm31, %v17, 0
    %v42 = vsel %vm31, %v18, 0
    %v45 = vsel %vm31, %v19, 0
    %v48 = vsel %vm31, %v20, 0
    %v51 = vsel %vm31, %v21, 0
    %v54 = vsel %vm31, %v22, 0
    %56 = vmatpush.msra.mxu0 0.0
    %57 = vmatpush.msra.mxu0 0.0
    %58 = vmatpush.msra.mxu0 0.0
    %59 = vmatpush.msra.mxu0 0.0
    %60 = vmatpush.msra.mxu0 0.0
    %61 = vmatpush.msra.mxu0 0.0
    %62 = vmatpush.msra.mxu0 0.0
    %63 = vmatpush.msra.mxu0 0.0
    %64 = vmatpush.msra.mxu0 0.0
    %65 = vmatpush.msra.mxu0 0.0
    %66 = vmatpush.msra.mxu0 0.0
    %67 = vmatpush.msra.mxu0 0.0
    %68 = vmatpush.msra.mxu0 %v26
    %69 = vmatpush.msra.mxu0 %v25
    %70 = vmatpush.msra.mxu0 %v24
    %71 = vmatpush.msra.mxu0 %v23
    %72 = vmatmul.f32.gmra.mxu0 %v33
    %v73 = vpop.f32.mrf.mxu0
    %v74 = vadd.f32 %v29, %v73
    %75 = vmatmul.f32.gmra.mxu0 %v36
    %v76 = vpop.f32.mrf.mxu0
    %v77 = vadd.f32 %v29, %v76
    %78 = vmatmul.f32.gmra.mxu0 %v39
    %v79 = vpop.f32.mrf.mxu0
    %v80 = vadd.f32 %v29, %v79
    %81 = vmatmul.f32.gmra.mxu0 %v42
    %v82 = vpop.f32.mrf.mxu0
    %v83 = vadd.f32 %v29, %v82
    %84 = vmatmul.f32.gmra.mxu0 %v45
    %v85 = vpop.f32.mrf.mxu0
    %v86 = vadd.f32 %v29, %v85
    %87 = vmatmul.f32.gmra.mxu0 %v48
    %v88 = vpop.f32.mrf.mxu0
    %v89 = vadd.f32 %v29, %v88
    %90 = vmatmul.f32.gmra.mxu0 %v51
    %v91 = vpop.f32.mrf.mxu0
    %v92 = vadd.f32 %v29, %v91
    %93 = vmatmul.f32.gmra.mxu0 %v54
    %v94 = vpop.f32.mrf.mxu0
    %v95 = vadd.f32 %v29, %v94
    %96 = vdwg.mxu0
    %v97 = vmul.f32 %v74, %v74
    %v98 = vmul.f32 %v77, %v77
    %v99 = vmul.f32 %v80, %v80
    %v100 = vmul.f32 %v83, %v83
    %v101 = vmul.f32 %v86, %v86
    %v102 = vmul.f32 %v89, %v89
    %v103 = vmul.f32 %v92, %v92
    %v104 = vmul.f32 %v95, %v95
    %105 = vadd.xlane.f32.xlu0 %v97
    %v106 = vpop.xlane.xlu0 %105
    %107 = vadd.xlane.f32.xlu0 %v98
    %v108 = vpop.xlane.xlu0 %107
    %109 = vadd.xlane.f32.xlu0 %v99
    %v110 = vpop.xlane.xlu0 %109
    %111 = vadd.xlane.f32.xlu0 %v100
    %v112 = vpop.xlane.xlu0 %111
    %113 = vadd.xlane.f32.xlu0 %v101
    %v114 = vpop.xlane.xlu0 %113
    %115 = vadd.xlane.f32.xlu0 %v102
    %v116 = vpop.xlane.xlu0 %115
    %117 = vadd.xlane.f32.xlu0 %v103
    %v118 = vpop.xlane.xlu0 %117
    %119 = vadd.xlane.f32.xlu0 %v104
    %v120 = vpop.xlane.xlu0 %119
    %v121 = vrsqrt.pop %v106
    %v122 = vmul.f32 %v121, %v106
    %v123 = vmul.f32 %v122, %v121
    %v124 = vmul.f32 0.5, %v123
    %v125 = vsub.f32 1.5, %v124
    %v126 = vmul.f32 %v121, %v125
    %vm127 = vweird.f32 %v106
    %vm128 = vweird.f32 %v121
    %vm129 = vmor %vm127, %vm128
    %v130 = vsel %vm129, %v121, %v126
    %v131 = vrsqrt.pop %v108
    %v132 = vmul.f32 %v131, %v108
    %v133 = vmul.f32 %v132, %v131
    %v134 = vmul.f32 0.5, %v133
    %v135 = vsub.f32 1.5, %v134
    %v136 = vmul.f32 %v131, %v135
    %vm137 = vweird.f32 %v108
    %vm138 = vweird.f32 %v131
    %vm139 = vmor %vm137, %vm138
    %v140 = vsel %vm139, %v131, %v136
    %v141 = vrsqrt.pop %v110
    %v142 = vmul.f32 %v141, %v110
    %v143 = vmul.f32 %v142, %v141
    %v144 = vmul.f32 0.5, %v143
    %v145 = vsub.f32 1.5, %v144
    %v146 = vmul.f32 %v141, %v145
    %vm147 = vweird.f32 %v110
    %vm148 = vweird.f32 %v141
    %vm149 = vmor %vm147, %vm148
    %v150 = vsel %vm149, %v141, %v146
    %v151 = vrsqrt.pop %v112
    %v152 = vmul.f32 %v151, %v112
    %v153 = vmul.f32 %v152, %v151
    %v154 = vmul.f32 0.5, %v153
    %v155 = vsub.f32 1.5, %v154
    %v156 = vmul.f32 %v151, %v155
    %vm157 = vweird.f32 %v112
    %vm158 = vweird.f32 %v151
    %vm159 = vmor %vm157, %vm158
    %v160 = vsel %vm159, %v151, %v156
    %v161 = vrsqrt.pop %v114
    %v162 = vmul.f32 %v161, %v114
    %v163 = vmul.f32 %v162, %v161
    %v164 = vmul.f32 0.5, %v163
    %v165 = vsub.f32 1.5, %v164
    %v166 = vmul.f32 %v161, %v165
    %vm167 = vweird.f32 %v114
    %vm168 = vweird.f32 %v161
    %vm169 = vmor %vm167, %vm168
    %v170 = vsel %vm169, %v161, %v166
    %v171 = vrsqrt.pop %v116
    %v172 = vmul.f32 %v171, %v116
    %v173 = vmul.f32 %v172, %v171
    %v174 = vmul.f32 0.5, %v173
    %v175 = vsub.f32 1.5, %v174
    %v176 = vmul.f32 %v171, %v175
    %vm177 = vweird.f32 %v116
    %vm178 = vweird.f32 %v171
    %vm179 = vmor %vm177, %vm178
    %v180 = vsel %vm179, %v171, %v176
    %v181 = vrsqrt.pop %v118
    %v182 = vmul.f32 %v181, %v118
    %v183 = vmul.f32 %v182, %v181
    %v184 = vmul.f32 0.5, %v183
    %v185 = vsub.f32 1.5, %v184
    %v186 = vmul.f32 %v181, %v185
    %vm187 = vweird.f32 %v118
    %vm188 = vweird.f32 %v181
    %vm189 = vmor %vm187, %vm188
    %v190 = vsel %vm189, %v181, %v186
    %v191 = vrsqrt.pop %v120
    %v192 = vmul.f32 %v191, %v120
    %v193 = vmul.f32 %v192, %v191
    %v194 = vmul.f32 0.5, %v193
    %v195 = vsub.f32 1.5, %v194
    %v196 = vmul.f32 %v191, %v195
    %vm197 = vweird.f32 %v120
    %vm198 = vweird.f32 %v191
    %vm199 = vmor %vm197, %vm198
    %v200 = vsel %vm199, %v191, %v196
    %v201 = vmul.f32 %v74, %v130
    %v202 = vmul.f32 %v77, %v140
    %v203 = vmul.f32 %v80, %v150
    %v204 = vmul.f32 %v83, %v160
    %v205 = vmul.f32 %v86, %v170
    %v206 = vmul.f32 %v89, %v180
    %v207 = vmul.f32 %v92, %v190
    %v208 = vmul.f32 %v95, %v200
    %209 = vst [vmem:[#allocation2] sm:$0xff] %v201
    %210 = vst [vmem:[#allocation2 + $0x8] sm:$0xff] %v202
    %211 = vst [vmem:[#allocation2 + $0x10] sm:$0xff] %v203
    %212 = vst [vmem:[#allocation2 + $0x18] sm:$0xff] %v204
    %213 = vst [vmem:[#allocation2 + $0x20] sm:$0xff] %v205
    %214 = vst [vmem:[#allocation2 + $0x28] sm:$0xff] %v206
    %215 = vst [vmem:[#allocation2 + $0x30] sm:$0xff] %v207
    %216 = vst [vmem:[#allocation2 + $0x38] sm:$0xff] %v208
    // Predicated region
    $region14: #{tpu_custom_call.1} parent=1 // pred_check
      _
    $region15: #{tpu_custom_call.1} parent=1 // pred_check_branch
      %218 = sbr.rel (0) target = $region17
    $region16: #{tpu_custom_call.1} parent=1 // pred_region
      %220 = vsyncadd [#allocation3], 0
      %s221 = sshll.u32 [#allocation2], 4
      %s222 = int_to_ptr.vmem [resolvable:$true] %s221
      %s223 = sshll.u32 %s3, 4
      %s224 = int_to_ptr.hbm [resolvable:$true] %s223
      %229 = dma.vmem_to_hbm [thread:$0]  %s222, 1024, %s224, [#allocation3], 128, 128, 8
    $region17: #{tpu_custom_call.1} parent=1 // pred_fallthru
      _
    // Predicated region
    $region18: #{tpu_custom_call.1} parent=1 // pred_check
      _
    $region19: #{tpu_custom_call.1} parent=1 // pred_check_branch
      %231 = sbr.rel (0) target = $region21
    $region20: #{tpu_custom_call.1} parent=1 // pred_region
      %233 = dma.done [#allocation3], 1024
    $region21: #{tpu_custom_call.1} parent=1 // pred_fallthru
      _
    %234 = vsyncpa [#allocation3], 1

</llo_original>
